<compile_context>
chip_gen: v5e
topology: v5e:2x2
jax: 0.10.0
libtpu: 0.0.40
codegen_flags: <defaults>
</compile_context>

<pallas_src>
import jax
import jax.numpy as jnp
from jax.experimental import pallas as pl
from jax.experimental.pallas import tpu as pltpu

EPS = 1e-5


# ----------------------------------------------------------------------------
# Kernel
# ----------------------------------------------------------------------------
def _bn_fold(y, gamma, beta):
    """Training-mode BatchNorm (biased var) folded to one scale/shift.

    y: (B, T) f32; gamma/beta: (1, T) f32. Single pass: sum and sum-of-squares
    in f32; variance clamped to >= 0 to guard against cancellation.
    """
    inv_b = 1.0 / y.shape[0]
    mu = jnp.sum(y, axis=0, keepdims=True) * inv_b
    ms = jnp.sum(y * y, axis=0, keepdims=True) * inv_b
    var = jnp.maximum(ms - mu * mu, 0.0)
    scale = gamma * jax.lax.rsqrt(var + EPS)
    shift = beta - mu * scale
    return y * scale + shift


def glu_layer_kernel(x_ref, wa_ref, wg_ref, gb_ref, o_ref, acc_a, acc_g):
    # x:      (B, tile_k)        f32 (cast to weight dtype in-kernel)
    # wa, wg: (tile_k, tile_n)   weight column tiles for value / gate halves
    # gb:     (8, tile_n)        rows 0..3 = gamma_a, beta_a, gamma_g, beta_g
    # o:      (B, tile_n)
    # acc_*:  (B, tile_n) f32 VMEM scratch accumulators (persist across K steps)
    k = pl.program_id(1)

    @pl.when(k == 0)
    def _():
        acc_a[...] = jnp.zeros_like(acc_a)
        acc_g[...] = jnp.zeros_like(acc_g)

    x = x_ref[...]
    if x.dtype != wa_ref.dtype:
        # In-kernel cast to MXU operand dtype (VPU work hidden under the dots;
        # avoids a separate wrapper-side cast pass over x in HBM).
        x = x.astype(wa_ref.dtype)

    acc_a[...] += jnp.dot(x, wa_ref[...], preferred_element_type=jnp.float32)
    acc_g[...] += jnp.dot(x, wg_ref[...], preferred_element_type=jnp.float32)

    @pl.when(k == pl.num_programs(1) - 1)
    def _():
        gb = gb_ref[...]
        a = _bn_fold(acc_a[...], gb[0:1, :], gb[1:2, :])
        g = _bn_fold(acc_g[...], gb[2:3, :], gb[3:4, :])
        o_ref[...] = (a * jax.nn.sigmoid(g)).astype(o_ref.dtype)


# ----------------------------------------------------------------------------
# Parameter packing (do ONCE at init time, not per forward call)
# ----------------------------------------------------------------------------
def pack_glu_params(weight, gamma, beta, bias=None, *, matmul_dtype=jnp.bfloat16):
    """Pre-pack GLULayer parameters for the Pallas kernel.

    weight: (Out, In) PyTorch nn.Linear layout.
    gamma, beta: (Out,) BatchNorm1d affine parameters.
    bias: accepted for API parity only; training-mode BatchNorm statistics
          absorb any additive per-feature bias, so it is never used.
    matmul_dtype: MXU operand dtype for the weights (default bf16; pass None
          to keep f32 operands). Accumulation / BN / GLU stay f32 regardless.
    """
    del bias  # algebraically cancelled by training-mode batch statistics
    Out, In = weight.shape
    assert Out % 2 == 0, "GLU requires an even output feature dimension"
    half = Out // 2

    w_t = weight.T                              # (In, Out), features on lanes
    wa, wg = w_t[:, :half], w_t[:, half:]       # GLU split done on the weights
    if matmul_dtype is not None:
        wa = wa.astype(matmul_dtype)
        wg = wg.astype(matmul_dtype)

    # Pack gamma/beta for both halves into one (8, half) slab (rows 4..7 pad).
    gb = jnp.zeros((8, half), dtype=jnp.float32)
    gb = gb.at[0].set(gamma[:half].astype(jnp.float32))
    gb = gb.at[1].set(beta[:half].astype(jnp.float32))
    gb = gb.at[2].set(gamma[half:].astype(jnp.float32))
    gb = gb.at[3].set(beta[half:].astype(jnp.float32))

    return {"wa": wa, "wg": wg, "gb": gb}


# ----------------------------------------------------------------------------
# Tiling / VMEM budgeting
# ----------------------------------------------------------------------------
def _vmem_capacity_bytes():
    try:
        return int(pltpu.get_tpu_info().vmem_capacity_bytes)
    except Exception:
        return 64 * 1024 * 1024        # conservative (v7x per-TC VMEM)


def _footprint_bytes(B, In, tile_n, tile_k, w_itemsize, out_itemsize):
    num_k = In // tile_k
    x_bufs = 1 if num_k == 1 else 2
    return (x_bufs * B * tile_k * 4            # x block(s), f32
            + 2 * 2 * tile_k * tile_n * w_itemsize   # 2 weight halves, 2 buffers
            + 2 * 8 * tile_n * 4                     # packed gamma/beta
            + 2 * B * tile_n * out_itemsize          # output buffers
            + 2 * B * tile_n * 4)                    # f32 accumulators


def _select_tiles(B, In, half, w_itemsize, out_itemsize, vmem_budget):
    n_cands = [c for c in (512, 256, 128) if half % c == 0] or [half]
    k_cands = [In] + [c for c in (2048, 1024, 512, 256) if c < In and In % c == 0]

    for tn in n_cands:                           # largest lane-dense tile first
        for tk in k_cands:                       # prefer full K (no reduction)
            if _footprint_bytes(B, In, tn, tk, w_itemsize, out_itemsize) <= vmem_budget:
                return tn, tk
    return n_cands[-1], k_cands[-1]              # smallest available fallback


# ----------------------------------------------------------------------------
# Forward wrapper
# ----------------------------------------------------------------------------
def glu_layer(x, params, *, out_dtype=None, tile_n=None, tile_k=None):
    """GLULayer forward: x (B, In), params from pack_glu_params()."""
    B, In = x.shape
    wa, wg, gb = params["wa"], params["wg"], params["gb"]
    assert wa.shape[0] == In, "weight / input size mismatch"
    half = wa.shape[1]
    out_dtype = jnp.dtype(out_dtype) if out_dtype is not None else x.dtype

    w_itemsize = jnp.dtype(wa.dtype).itemsize
    out_itemsize = jnp.dtype(out_dtype).itemsize

    capacity = _vmem_capacity_bytes()
    budget = int(capacity * 0.6)                 # leave headroom for the compiler

    auto_n, auto_k = _select_tiles(B, In, half, w_itemsize, out_itemsize, budget)
    tile_n = tile_n or auto_n
    tile_k = tile_k or auto_k
    assert half % tile_n == 0 and In % tile_k == 0

    # Megacore: make sure the "parallel" feature axis has >=2 steps when the
    # feature dim allows (v7x has 2 TensorCores; with 1 tile one of them idles).
    if half // tile_n == 1 and tile_n % 256 == 0:
        tile_n //= 2

    num_n = half // tile_n
    num_k = In // tile_k

    footprint = _footprint_bytes(B, In, tile_n, tile_k, w_itemsize, out_itemsize)
    vmem_limit = int(min(capacity, max(2 * footprint + (8 << 20), 32 << 20)))

    cost = pl.CostEstimate(
        flops=4 * B * In * half,                 # two (B,In)x(In,half) matmuls
        transcendentals=B * half,                # sigmoid
        bytes_accessed=(num_n * B * In * 4       # x re-read per feature tile
                        + 2 * In * half * w_itemsize
                        + 8 * half * 4
                        + B * half * out_itemsize),
    )

    return pl.pallas_call(
        glu_layer_kernel,
        out_shape=jax.ShapeDtypeStruct((B, half), out_dtype),
        grid=(num_n, num_k),                     # reduction axis (K) last
        in_specs=[
            pl.BlockSpec((B, tile_k), lambda j, k: (0, k)),       # x
            pl.BlockSpec((tile_k, tile_n), lambda j, k: (k, j)),  # W value half
            pl.BlockSpec((tile_k, tile_n), lambda j, k: (k, j)),  # W gate half
            pl.BlockSpec((8, tile_n), lambda j, k: (0, j)),       # gamma/beta slab
        ],
        out_specs=pl.BlockSpec((B, tile_n), lambda j, k: (0, j)),
        scratch_shapes=[
            pltpu.VMEM((B, tile_n), jnp.float32),                 # acc (value)
            pltpu.VMEM((B, tile_n), jnp.float32),                 # acc (gate)
        ],
        compiler_params=pltpu.CompilerParams(
            dimension_semantics=("parallel", "arbitrary"),
            vmem_limit_bytes=vmem_limit,
        ),
        cost_estimate=cost,
    )(x, wa, wg, gb)


# ----------------------------------------------------------------------------
# Pure-JAX reference (mirrors the PyTorch module in training mode)
# ----------------------------------------------------------------------------
def glu_layer_ref(x, weight, bias, gamma, beta):
    y = x @ weight.T + bias
    mu = jnp.mean(y, axis=0, keepdims=True)
    var = jnp.mean((y - mu) ** 2, axis=0, keepdims=True)
    y_hat = (y - mu) / jnp.sqrt(var + EPS) * gamma + beta
    half = y_hat.shape[-1] // 2
    return y_hat[:, :half] * jax.nn.sigmoid(y_hat[:, half:])


if __name__ == "__main__":
    # Small shapes consistent with the module: batch=8, input_size=32,
    # output_size=64 -> GLU output is (8, 32).
    B, INPUT_SIZE, OUTPUT_SIZE = 8, 32, 64

    key = jax.random.PRNGKey(0)
    kx, kw, kb, kg, kbe = jax.random.split(key, 5)

    x = jax.random.normal(kx, (B, INPUT_SIZE), dtype=jnp.float32)
    weight = jax.random.normal(kw, (OUTPUT_SIZE, INPUT_SIZE), dtype=jnp.float32) * 0.1
    bias = jax.random.normal(kb, (OUTPUT_SIZE,), dtype=jnp.float32) * 0.1
    gamma = 1.0 + 0.1 * jax.random.normal(kg, (OUTPUT_SIZE,), dtype=jnp.float32)
    beta = 0.1 * jax.random.normal(kbe, (OUTPUT_SIZE,), dtype=jnp.float32)

    ref = glu_layer_ref(x, weight, bias, gamma, beta)

    # f32 MXU-operand path: tight tolerance vs the two-pass reference.
    params_f32 = pack_glu_params(weight, gamma, beta, bias, matmul_dtype=None)
    out_f32 = jax.block_until_ready(glu_layer(x, params_f32))
    assert out_f32.shape == (B, OUTPUT_SIZE // 2), out_f32.shape
    assert jnp.allclose(out_f32, ref, atol=5e-4, rtol=5e-4), "f32 path mismatch"

    # Default bf16 MXU-operand path (f32 accumulation / BN / GLU tail): the
    # batch statistics themselves change slightly, so tolerance is looser.
    params_bf16 = pack_glu_params(weight, gamma, beta, bias)
    out_bf16 = jax.block_until_ready(glu_layer(x, params_bf16))
    assert out_bf16.shape == (B, OUTPUT_SIZE // 2), out_bf16.shape
    assert jnp.allclose(out_bf16, ref, atol=5e-2, rtol=5e-2), "bf16 path mismatch"

    print("KERNEL_OK")
</pallas_src>

<mosaic_0001>
module attributes {stable_mosaic.version = 11 : i64} {
  func.func @glu_layer_kernel(%arg0: i32, %arg1: i32, %arg2: memref<8x32xf32, #tpu.memory_space<vmem>>, %arg3: memref<32x32xf32, #tpu.memory_space<vmem>>, %arg4: memref<32x32xf32, #tpu.memory_space<vmem>>, %arg5: memref<8x32xf32, #tpu.memory_space<vmem>>, %arg6: memref<8x32xf32, #tpu.memory_space<vmem>>, %arg7: memref<8x32xf32, #tpu.memory_space<vmem>>, %arg8: memref<8x32xf32, #tpu.memory_space<vmem>>) attributes {dimension_semantics = [#tpu.dimension_semantics<parallel>, #tpu.dimension_semantics<arbitrary>], iteration_bounds = array<i64: 1, 1>, scalar_prefetch = 0 : i64, scratch_operands = 2 : i64, tpu.core_type = #tpu.core_type<tc>, window_params = [{transform_indices = @transform_0, window_bounds = array<i64: 8, 32>}, {transform_indices = @transform_1, window_bounds = array<i64: 32, 32>}, {transform_indices = @transform_2, window_bounds = array<i64: 32, 32>}, {transform_indices = @transform_3, window_bounds = array<i64: 8, 32>}, {transform_indices = @transform_4, window_bounds = array<i64: 8, 32>}]} {
    %c0_i32 = arith.constant 0 : i32
    %0 = arith.cmpi eq, %arg1, %c0_i32 : i32
    %1 = arith.extui %0 : i1 to i32
    %c0_i32_0 = arith.constant 0 : i32
    %2 = arith.cmpi ne, %1, %c0_i32_0 : i32
    scf.if %2 {
      %cst_17 = arith.constant 0.000000e+00 : f32
      %17 = vector.broadcast %cst_17 : f32 to vector<8x32xf32>
      %c0_18 = arith.constant 0 : index
      %c0_19 = arith.constant 0 : index
      %18 = vector.load %arg7[%c0_18, %c0_19] : memref<8x32xf32, #tpu.memory_space<vmem>>, vector<8x32xf32>
      tpu.vector_store %arg7[%c0_18, %c0_19], %17 {strides = array<i32>} : memref<8x32xf32, #tpu.memory_space<vmem>>, vector<8x32xf32>,
      %cst_20 = arith.constant 0.000000e+00 : f32
      %19 = vector.broadcast %cst_20 : f32 to vector<8x32xf32>
      %c0_21 = arith.constant 0 : index
      %c0_22 = arith.constant 0 : index
      %20 = vector.load %arg8[%c0_21, %c0_22] : memref<8x32xf32, #tpu.memory_space<vmem>>, vector<8x32xf32>
      tpu.vector_store %arg8[%c0_21, %c0_22], %19 {strides = array<i32>} : memref<8x32xf32, #tpu.memory_space<vmem>>, vector<8x32xf32>,
    } else {
    }
    %c0 = arith.constant 0 : index
    %c0_1 = arith.constant 0 : index
    %3 = vector.load %arg2[%c0, %c0_1] : memref<8x32xf32, #tpu.memory_space<vmem>>, vector<8x32xf32>
    %c0_2 = arith.constant 0 : index
    %c0_3 = arith.constant 0 : index
    %4 = vector.load %arg7[%c0_2, %c0_3] : memref<8x32xf32, #tpu.memory_space<vmem>>, vector<8x32xf32>
    %c0_4 = arith.constant 0 : index
    %c0_5 = arith.constant 0 : index
    %5 = vector.load %arg3[%c0_4, %c0_5] : memref<32x32xf32, #tpu.memory_space<vmem>>, vector<32x32xf32>
    %cst = arith.constant dense<0.000000e+00> : vector<8x32xf32>
    %6 = tpu.matmul %3, %5, %cst {dimension_numbers = #tpu.dot_dimension_numbers<[1], [0], [0], [1], [0, 0, 1, 1], [], []>} : vector<8x32xf32>, vector<32x32xf32>, vector<8x32xf32> -> vector<8x32xf32>
    %7 = arith.addf %4, %6 : vector<8x32xf32>
    %c0_6 = arith.constant 0 : index
    %c0_7 = arith.constant 0 : index
    %8 = vector.load %arg7[%c0_6, %c0_7] : memref<8x32xf32, #tpu.memory_space<vmem>>, vector<8x32xf32>
    tpu.vector_store %arg7[%c0_6, %c0_7], %7 {strides = array<i32>} : memref<8x32xf32, #tpu.memory_space<vmem>>, vector<8x32xf32>,
    %c0_8 = arith.constant 0 : index
    %c0_9 = arith.constant 0 : index
    %9 = vector.load %arg8[%c0_8, %c0_9] : memref<8x32xf32, #tpu.memory_space<vmem>>, vector<8x32xf32>
    %c0_10 = arith.constant 0 : index
    %c0_11 = arith.constant 0 : index
    %10 = vector.load %arg4[%c0_10, %c0_11] : memref<32x32xf32, #tpu.memory_space<vmem>>, vector<32x32xf32>
    %cst_12 = arith.constant dense<0.000000e+00> : vector<8x32xf32>
    %11 = tpu.matmul %3, %10, %cst_12 {dimension_numbers = #tpu.dot_dimension_numbers<[1], [0], [0], [1], [0, 0, 1, 1], [], []>} : vector<8x32xf32>, vector<32x32xf32>, vector<8x32xf32> -> vector<8x32xf32>
    %12 = arith.addf %9, %11 : vector<8x32xf32>
    %c0_13 = arith.constant 0 : index
    %c0_14 = arith.constant 0 : index
    %13 = vector.load %arg8[%c0_13, %c0_14] : memref<8x32xf32, #tpu.memory_space<vmem>>, vector<8x32xf32>
    tpu.vector_store %arg8[%c0_13, %c0_14], %12 {strides = array<i32>} : memref<8x32xf32, #tpu.memory_space<vmem>>, vector<8x32xf32>,
    %c0_i32_15 = arith.constant 0 : i32
    %14 = arith.cmpi eq, %arg1, %c0_i32_15 : i32
    %15 = arith.extui %14 : i1 to i32
    %c0_i32_16 = arith.constant 0 : i32
    %16 = arith.cmpi ne, %15, %c0_i32_16 : i32
    scf.if %16 {
      %c0_17 = arith.constant 0 : index
      %c0_18 = arith.constant 0 : index
      %17 = vector.load %arg5[%c0_17, %c0_18] : memref<8x32xf32, #tpu.memory_space<vmem>>, vector<8x32xf32>
      %c0_19 = arith.constant 0 : index
      %c0_20 = arith.constant 0 : index
      %18 = vector.load %arg7[%c0_19, %c0_20] : memref<8x32xf32, #tpu.memory_space<vmem>>, vector<8x32xf32>
      %19 = vector.extract_strided_slice %17 {offsets = [0, 0], sizes = [1, 32], strides = [1, 1]} : vector<8x32xf32> to vector<1x32xf32>
      %20 = vector.extract_strided_slice %17 {offsets = [1, 0], sizes = [1, 32], strides = [1, 1]} : vector<8x32xf32> to vector<1x32xf32>
      %cst_21 = arith.constant dense<0.000000e+00> : vector<32xf32>
      %21 = vector.multi_reduction <add>, %18, %cst_21 [0] : vector<8x32xf32> to vector<32xf32>
      %22 = vector.shape_cast %21 : vector<32xf32> to vector<1x32xf32>
      %cst_22 = arith.constant 1.250000e-01 : f32
      %23 = vector.broadcast %cst_22 : f32 to vector<1x32xf32>
      %24 = arith.mulf %22, %23 : vector<1x32xf32>
      %25 = arith.mulf %18, %18 : vector<8x32xf32>
      %cst_23 = arith.constant dense<0.000000e+00> : vector<32xf32>
      %26 = vector.multi_reduction <add>, %25, %cst_23 [0] : vector<8x32xf32> to vector<32xf32>
      %27 = vector.shape_cast %26 : vector<32xf32> to vector<1x32xf32>
      %cst_24 = arith.constant 1.250000e-01 : f32
      %28 = vector.broadcast %cst_24 : f32 to vector<1x32xf32>
      %29 = arith.mulf %27, %28 : vector<1x32xf32>
      %30 = arith.mulf %24, %24 : vector<1x32xf32>
      %31 = arith.subf %29, %30 : vector<1x32xf32>
      %cst_25 = arith.constant 0.000000e+00 : f32
      %32 = vector.broadcast %cst_25 : f32 to vector<1x32xf32>
      %33 = arith.maximumf %31, %32 : vector<1x32xf32>
      %cst_26 = arith.constant 9.99999974E-6 : f32
      %34 = vector.broadcast %cst_26 : f32 to vector<1x32xf32>
      %35 = arith.addf %33, %34 : vector<1x32xf32>
      %36 = math.rsqrt %35 : vector<1x32xf32>
      %37 = arith.mulf %19, %36 : vector<1x32xf32>
      %38 = arith.mulf %24, %37 : vector<1x32xf32>
      %39 = arith.subf %20, %38 : vector<1x32xf32>
      %40 = vector.broadcast %37 : vector<1x32xf32> to vector<8x32xf32>
      %41 = arith.mulf %18, %40 : vector<8x32xf32>
      %42 = vector.broadcast %39 : vector<1x32xf32> to vector<8x32xf32>
      %43 = arith.addf %41, %42 : vector<8x32xf32>
      %c0_27 = arith.constant 0 : index
      %c0_28 = arith.constant 0 : index
      %44 = vector.load %arg8[%c0_27, %c0_28] : memref<8x32xf32, #tpu.memory_space<vmem>>, vector<8x32xf32>
      %45 = vector.extract_strided_slice %17 {offsets = [2, 0], sizes = [1, 32], strides = [1, 1]} : vector<8x32xf32> to vector<1x32xf32>
      %46 = vector.extract_strided_slice %17 {offsets = [3, 0], sizes = [1, 32], strides = [1, 1]} : vector<8x32xf32> to vector<1x32xf32>
      %cst_29 = arith.constant dense<0.000000e+00> : vector<32xf32>
      %47 = vector.multi_reduction <add>, %44, %cst_29 [0] : vector<8x32xf32> to vector<32xf32>
      %48 = vector.shape_cast %47 : vector<32xf32> to vector<1x32xf32>
      %cst_30 = arith.constant 1.250000e-01 : f32
      %49 = vector.broadcast %cst_30 : f32 to vector<1x32xf32>
      %50 = arith.mulf %48, %49 : vector<1x32xf32>
      %51 = arith.mulf %44, %44 : vector<8x32xf32>
      %cst_31 = arith.constant dense<0.000000e+00> : vector<32xf32>
      %52 = vector.multi_reduction <add>, %51, %cst_31 [0] : vector<8x32xf32> to vector<32xf32>
      %53 = vector.shape_cast %52 : vector<32xf32> to vector<1x32xf32>
      %cst_32 = arith.constant 1.250000e-01 : f32
      %54 = vector.broadcast %cst_32 : f32 to vector<1x32xf32>
      %55 = arith.mulf %53, %54 : vector<1x32xf32>
      %56 = arith.mulf %50, %50 : vector<1x32xf32>
      %57 = arith.subf %55, %56 : vector<1x32xf32>
      %cst_33 = arith.constant 0.000000e+00 : f32
      %58 = vector.broadcast %cst_33 : f32 to vector<1x32xf32>
      %59 = arith.maximumf %57, %58 : vector<1x32xf32>
      %cst_34 = arith.constant 9.99999974E-6 : f32
      %60 = vector.broadcast %cst_34 : f32 to vector<1x32xf32>
      %61 = arith.addf %59, %60 : vector<1x32xf32>
      %62 = math.rsqrt %61 : vector<1x32xf32>
      %63 = arith.mulf %45, %62 : vector<1x32xf32>
      %64 = arith.mulf %50, %63 : vector<1x32xf32>
      %65 = arith.subf %46, %64 : vector<1x32xf32>
      %66 = vector.broadcast %63 : vector<1x32xf32> to vector<8x32xf32>
      %67 = arith.mulf %44, %66 : vector<8x32xf32>
      %68 = vector.broadcast %65 : vector<1x32xf32> to vector<8x32xf32>
      %69 = arith.addf %67, %68 : vector<8x32xf32>
      %70 = arith.negf %69 : vector<8x32xf32>
      %71 = math.exp %70 : vector<8x32xf32>
      %cst_35 = arith.constant 1.000000e+00 : f32
      %72 = vector.broadcast %cst_35 : f32 to vector<8x32xf32>
      %73 = arith.addf %72, %71 : vector<8x32xf32>
      %74 = arith.divf %72, %73 : vector<8x32xf32>
      %75 = arith.mulf %43, %74 : vector<8x32xf32>
      %c0_36 = arith.constant 0 : index
      %c0_37 = arith.constant 0 : index
      %76 = vector.load %arg6[%c0_36, %c0_37] : memref<8x32xf32, #tpu.memory_space<vmem>>, vector<8x32xf32>
      tpu.vector_store %arg6[%c0_36, %c0_37], %75 {strides = array<i32>} : memref<8x32xf32, #tpu.memory_space<vmem>>, vector<8x32xf32>,
    } else {
    }
    return
  }
  func.func @transform_0(%arg0: i32, %arg1: i32) -> (i32, i32) {
    %c0_i32 = arith.constant 0 : i32
    %c0_i32_0 = arith.constant 0 : i32
    return %c0_i32, %arg1 : i32, i32
  }
  func.func @transform_1(%arg0: i32, %arg1: i32) -> (i32, i32) {
    %c0_i32 = arith.constant 0 : i32
    return %arg1, %arg0 : i32, i32
  }
  func.func @transform_2(%arg0: i32, %arg1: i32) -> (i32, i32) {
    %c0_i32 = arith.constant 0 : i32
    return %arg1, %arg0 : i32, i32
  }
  func.func @transform_3(%arg0: i32, %arg1: i32) -> (i32, i32) {
    %c0_i32 = arith.constant 0 : i32
    %c0_i32_0 = arith.constant 0 : i32
    return %c0_i32, %arg0 : i32, i32
  }
  func.func @transform_4(%arg0: i32, %arg1: i32) -> (i32, i32) {
    %c0_i32 = arith.constant 0 : i32
    %c0_i32_0 = arith.constant 0 : i32
    return %c0_i32, %arg0 : i32, i32
  }
}

</mosaic_0001>

<llo_original>
// kernel: tpu_custom_call.1
$region0: #{tpu_custom_call.1}
  #allocation0 [shape = 'u32[]', space=smem, size = 0x4, offset = 0x4, fixed_abs, tag = 'smem constant byte address 0x4 - core index']
  #allocation1 [shape = 'u32[72,128]{1,0:T(1,128)}', space=vmem, size = 0x9000, scoped, tag = 'internal scratch']
  #allocation2 [shape = 'f32[8,32]{1,0:T(8,128)}', space=vmem, size = 0x1000, scoped, tag = 'scratch operand']
  #allocation3 [shape = 'f32[8,32]{1,0:T(8,128)}', space=vmem, size = 0x1000, scoped, tag = 'scratch operand']
  %s0 = inlined_call_operand.hbm [shape: f32[8,32], index: 0, kind: input, shape index: {}]
  %s1 = inlined_call_operand.hbm [shape: f32[32,32], index: 1, kind: input, shape index: {}]
  %s2 = inlined_call_operand.hbm [shape: f32[32,32], index: 2, kind: input, shape index: {}]
  %s3 = inlined_call_operand.hbm [shape: f32[8,32], index: 3, kind: input, shape index: {}]
  %s4 = inlined_call_operand.hbm [shape: f32[8,32], index: 4, kind: output, shape index: {}]
  %s5 = sld [smem:[#allocation0]]
  $region50: #{tpu_custom_call.1} parent=0
    _
  %s7 = ssub.s32 1, %s5
  %s8 = scalar_select 0, %s7, %s5
  $region1: #{tpu_custom_call.1} parent=0
    #allocation4 [shape = 'u8[4096]{0}', space=vmem, size = 0x1000, scoped, tag = 'input window, operand 0, single buffered']
    #allocation5 [shape = 's32[1]{0}', space=sflag, size = 0x4, scoped, tag = 'scoped memory for tpu_custom_call.1']
    #allocation6 [shape = 's32[1]{0}', space=sflag, size = 0x4, scoped, tag = 'scoped memory for tpu_custom_call.1']
    #allocation7 [shape = 'u8[16384]{0}', space=vmem, size = 0x4000, scoped, tag = 'input window, operand 1, single buffered']
    #allocation8 [shape = 's32[1]{0}', space=sflag, size = 0x4, scoped, tag = 'scoped memory for tpu_custom_call.1']
    #allocation9 [shape = 'u8[16384]{0}', space=vmem, size = 0x4000, scoped, tag = 'input window, operand 2, single buffered']
    #allocation10 [shape = 'u8[4096]{0}', space=vmem, size = 0x1000, scoped, tag = 'input window, operand 3, single buffered']
    #allocation11 [shape = 's32[1]{0}', space=sflag, size = 0x4, scoped, tag = 'scoped memory for tpu_custom_call.1']
    #allocation12 [shape = 'u8[4096]{0}', space=vmem, size = 0x1000, scoped, tag = 'output window, operand 0, single buffered']
    %9 = vsyncpa [#allocation5], 0
    %10 = vsyncpa [#allocation8], 0
    %11 = vsyncpa [#allocation11], 0
    %12 = vsyncpa [#allocation6], 0
    // Predicated region
    $region2: #{tpu_custom_call.1} parent=1 // pred_check
      _
    $region3: #{tpu_custom_call.1} parent=1 // pred_check_branch
      %14 = sbr.rel (0) target = $region5
    $region4: #{tpu_custom_call.1} parent=1 // pred_region
      %16 = vsyncadd [#allocation5], 0
      %s18 = sshll.u32 %s0, 4
      %s19 = int_to_ptr.hbm [resolvable:$true] %s18
      %s20 = sshll.u32 [#allocation4], 4
      %s21 = int_to_ptr.vmem [resolvable:$true] %s20
      %23 = dma.hbm_to_vmem [thread:$0]  %s19, 128, %s21, [#allocation5]
    $region5: #{tpu_custom_call.1} parent=1 // pred_fallthru
      _
    // Predicated region
    $region6: #{tpu_custom_call.1} parent=1 // pred_check
      _
    $region7: #{tpu_custom_call.1} parent=1 // pred_check_branch
      %25 = sbr.rel (0) target = $region9
    $region8: #{tpu_custom_call.1} parent=1 // pred_region
      %27 = vsyncadd [#allocation8], 0
      %s28 = sshll.u32 %s1, 4
      %s29 = int_to_ptr.hbm [resolvable:$true] %s28
      %s30 = sshll.u32 [#allocation7], 4
      %s31 = int_to_ptr.vmem [resolvable:$true] %s30
      %36 = dma.hbm_to_vmem [thread:$0]  %s29, 512, %s31, [#allocation8], 128, 128, 8
    $region9: #{tpu_custom_call.1} parent=1 // pred_fallthru
      _
    // Predicated region
    $region10: #{tpu_custom_call.1} parent=1 // pred_check
      _
    $region11: #{tpu_custom_call.1} parent=1 // pred_check_branch
      %38 = sbr.rel (0) target = $region13
    $region12: #{tpu_custom_call.1} parent=1 // pred_region
      %40 = vsyncadd [#allocation8], 0
      %s41 = sshll.u32 %s2, 4
      %s42 = int_to_ptr.hbm [resolvable:$true] %s41
      %s43 = sshll.u32 [#allocation9], 4
      %s44 = int_to_ptr.vmem [resolvable:$true] %s43
      %49 = dma.hbm_to_vmem [thread:$0]  %s42, 512, %s44, [#allocation8], 128, 128, 8
    $region13: #{tpu_custom_call.1} parent=1 // pred_fallthru
      _
    // Predicated region
    $region14: #{tpu_custom_call.1} parent=1 // pred_check
      _
    $region15: #{tpu_custom_call.1} parent=1 // pred_check_branch
      %51 = sbr.rel (0) target = $region17
    $region16: #{tpu_custom_call.1} parent=1 // pred_region
      %53 = vsyncadd [#allocation11], 0
      %s55 = sshll.u32 %s3, 4
      %s56 = int_to_ptr.hbm [resolvable:$true] %s55
      %s57 = sshll.u32 [#allocation10], 4
      %s58 = int_to_ptr.vmem [resolvable:$true] %s57
      %60 = dma.hbm_to_vmem [thread:$0]  %s56, 128, %s58, [#allocation11]
    $region17: #{tpu_custom_call.1} parent=1 // pred_fallthru
      _
    // Predicated region
    $region18: #{tpu_custom_call.1} parent=1 // pred_check
      _
    $region19: #{tpu_custom_call.1} parent=1 // pred_check_branch
      %62 = sbr.rel (0) target = $region21
    $region20: #{tpu_custom_call.1} parent=1 // pred_region
      %64 = dma.done [#allocation5], 128
    $region21: #{tpu_custom_call.1} parent=1 // pred_fallthru
      _
    // Predicated region
    $region22: #{tpu_custom_call.1} parent=1 // pred_check
      _
    $region23: #{tpu_custom_call.1} parent=1 // pred_check_branch
      %66 = sbr.rel (0) target = $region25
    $region24: #{tpu_custom_call.1} parent=1 // pred_region
      %68 = dma.done [#allocation8], 512
    $region25: #{tpu_custom_call.1} parent=1 // pred_fallthru
      _
    // Predicated region
    $region26: #{tpu_custom_call.1} parent=1 // pred_check
      _
    $region27: #{tpu_custom_call.1} parent=1 // pred_check_branch
      %70 = sbr.rel (0) target = $region29
    $region28: #{tpu_custom_call.1} parent=1 // pred_region
      %72 = dma.done [#allocation8], 512
    $region29: #{tpu_custom_call.1} parent=1 // pred_fallthru
      _
    // Predicated region
    $region30: #{tpu_custom_call.1} parent=1 // pred_check
      _
    $region31: #{tpu_custom_call.1} parent=1 // pred_check_branch
      %74 = sbr.rel (0) target = $region33
    $region32: #{tpu_custom_call.1} parent=1 // pred_region
      %76 = dma.done [#allocation11], 128
    $region33: #{tpu_custom_call.1} parent=1 // pred_fallthru
      _
    %p77 = scmp.eq.s32.totalorder 0, 0
    // Predicated region
    $region34: #{tpu_custom_call.1} parent=1 // pred_check
      %p78 = pneg %p77
    $region35: #{tpu_custom_call.1} parent=1 // pred_check_branch
      %80 = sbr.rel (%p78) target = $region37
    $region36: #{tpu_custom_call.1} parent=1 // pred_region
      %vm81 = vcmask 261120
      %82 = vst.msk [vmem:[#allocation2] sm:$0xff] %vm81, 0.0
      %83 = vst.msk [vmem:[#allocation3] sm:$0xff] %vm81, 0.0
    $region37: #{tpu_custom_call.1} parent=1 // pred_fallthru
      _
    %v84 = vld [vmem:[#allocation4] sm:$0xff]
    %v85 = vld [vmem:[#allocation2] sm:$0xff]
    %v86 = vld [vmem:[#allocation7] sm:$0xff]
    %v87 = vld [vmem:[#allocation7 + $0x8] sm:$0xff]
    %v88 = vld [vmem:[#allocation7 + $0x10] sm:$0xff]
    %v89 = vld [vmem:[#allocation7 + $0x18] sm:$0xff]
    %vm90 = vcmask 261120
    %v92 = vsel %vm90, %v84, 0
    %94 = vmatpush.msra.mxu0 0.0
    %95 = vmatpush.msra.mxu0 0.0
    %96 = vmatpush.msra.mxu0 0.0
    %97 = vmatpush.msra.mxu0 0.0
    %98 = vmatpush.msra.mxu0 0.0
    %99 = vmatpush.msra.mxu0 0.0
    %100 = vmatpush.msra.mxu0 0.0
    %101 = vmatpush.msra.mxu0 0.0
    %102 = vmatpush.msra.mxu0 0.0
    %103 = vmatpush.msra.mxu0 0.0
    %104 = vmatpush.msra.mxu0 0.0
    %105 = vmatpush.msra.mxu0 0.0
    %106 = vmatpush.msra.mxu0 %v89
    %107 = vmatpush.msra.mxu0 %v88
    %108 = vmatpush.msra.mxu0 %v87
    %109 = vmatpush.msra.mxu0 %v86
    %110 = vmatmul.f32.gmra.mxu0 %v92
    %v111 = vpop.f32.mrf.mxu0
    %v112 = vadd.f32 0.0, %v111
    %113 = vdwg.mxu0
    %v114 = vadd.f32 %v85, %v112
    %115 = vst.msk [vmem:[#allocation2] sm:$0xff] %vm90, %v114
    %v116 = vld [vmem:[#allocation3] sm:$0xff]
    %v117 = vld [vmem:[#allocation9] sm:$0xff]
    %v118 = vld [vmem:[#allocation9 + $0x8] sm:$0xff]
    %v119 = vld [vmem:[#allocation9 + $0x10] sm:$0xff]
    %v120 = vld [vmem:[#allocation9 + $0x18] sm:$0xff]
    %121 = vmatpush.msra.mxu0 0.0
    %122 = vmatpush.msra.mxu0 0.0
    %123 = vmatpush.msra.mxu0 0.0
    %124 = vmatpush.msra.mxu0 0.0
    %125 = vmatpush.msra.mxu0 0.0
    %126 = vmatpush.msra.mxu0 0.0
    %127 = vmatpush.msra.mxu0 0.0
    %128 = vmatpush.msra.mxu0 0.0
    %129 = vmatpush.msra.mxu0 0.0
    %130 = vmatpush.msra.mxu0 0.0
    %131 = vmatpush.msra.mxu0 0.0
    %132 = vmatpush.msra.mxu0 0.0
    %133 = vmatpush.msra.mxu0 %v120
    %134 = vmatpush.msra.mxu0 %v119
    %135 = vmatpush.msra.mxu0 %v118
    %136 = vmatpush.msra.mxu0 %v117
    %137 = vmatmul.f32.gmra.mxu0 %v92
    %v138 = vpop.f32.mrf.mxu0
    %v139 = vadd.f32 0.0, %v138
    %140 = vdwg.mxu0
    %v141 = vadd.f32 %v116, %v139
    %142 = vst.msk [vmem:[#allocation3] sm:$0xff] %vm90, %v141
    // Predicated region
    $region38: #{tpu_custom_call.1} parent=1 // pred_check
      %p143 = pneg %p77
    $region39: #{tpu_custom_call.1} parent=1 // pred_check_branch
      %145 = sbr.rel (%p143) target = $region41
    $region40: #{tpu_custom_call.1} parent=1 // pred_region
      %v146 = vld [vmem:[#allocation10] sm:$0xff]
      %v147 = vld [vmem:[#allocation2] sm:$0xff]
      %v148 = vsel %vm90, %v147, 0.0
      %v149 = vrot.slane %v148, 4
      %v150 = vadd.f32 %v148, %v149
      %v151 = vrot.slane %v150, 2
      %v152 = vadd.f32 %v150, %v151
      %v153 = vrot.slane %v152, 1
      %v154 = vadd.f32 %v152, %v153
      %v155 = vmul.f32 %v154, 0.125
      %v156 = vmul.f32 %v147, %v147
      %v157 = vsel %vm90, %v156, 0.0
      %v158 = vrot.slane %v157, 4
      %v159 = vadd.f32 %v157, %v158
      %v160 = vrot.slane %v159, 2
      %v161 = vadd.f32 %v159, %v160
      %v162 = vrot.slane %v161, 1
      %v163 = vadd.f32 %v161, %v162
      %v164 = vmul.f32 %v163, 0.125
      %v165 = vmul.f32 %v155, %v155
      %v166 = vsub.f32 %v164, %v165
      %v167 = vmax.f32 %v166, 0.0
      %v168 = vadd.f32 %v167, 1e-05
      %v169 = vrsqrt.pop %v168
      %v170 = vmul.f32 %v169, %v168
      %v171 = vmul.f32 %v170, %v169
      %v172 = vmul.f32 0.5, %v171
      %v173 = vsub.f32 1.5, %v172
      %v174 = vmul.f32 %v169, %v173
      %vm175 = vweird.f32 %v168
      %vm176 = vweird.f32 %v169
      %vm177 = vmor %vm175, %vm176
      %v178 = vsel %vm177, %v169, %v174
      %v179 = vmul.f32 %v146, %v178
      %v180 = vmul.f32 %v155, %v179
      %v182 = vrot.slane %v180, 7
      %v184 = vsub.f32 %v146, %v182
      %v185 = vperm.slane %v179, 0
      %v186 = vmul.f32 %v147, %v185
      %v187 = vperm.slane %v184, 1
      %v188 = vadd.f32 %v186, %v187
      %v189 = vld [vmem:[#allocation3] sm:$0xff]
      %v190 = vsel %vm90, %v189, 0.0
      %v191 = vrot.slane %v190, 4
      %v192 = vadd.f32 %v190, %v191
      %v193 = vrot.slane %v192, 2
      %v194 = vadd.f32 %v192, %v193
      %v195 = vrot.slane %v194, 1
      %v196 = vadd.f32 %v194, %v195
      %v197 = vmul.f32 %v196, 0.125
      %v198 = vmul.f32 %v189, %v189
      %v199 = vsel %vm90, %v198, 0.0
      %v200 = vrot.slane %v199, 4
      %v201 = vadd.f32 %v199, %v200
      %v202 = vrot.slane %v201, 2
      %v203 = vadd.f32 %v201, %v202
      %v204 = vrot.slane %v203, 1
      %v205 = vadd.f32 %v203, %v204
      %v206 = vmul.f32 %v205, 0.125
      %v207 = vmul.f32 %v197, %v197
      %v208 = vsub.f32 %v206, %v207
      %v209 = vmax.f32 %v208, 0.0
      %v210 = vadd.f32 %v209, 1e-05
      %v211 = vrsqrt.pop %v210
      %v212 = vmul.f32 %v211, %v210
      %v213 = vmul.f32 %v212, %v211
      %v214 = vmul.f32 0.5, %v213
      %v215 = vsub.f32 1.5, %v214
      %v216 = vmul.f32 %v211, %v215
      %vm217 = vweird.f32 %v210
      %vm218 = vweird.f32 %v211
      %vm219 = vmor %vm217, %vm218
      %v220 = vsel %vm219, %v211, %v216
      %v221 = vmul.f32 %v146, %v220
      %v222 = vmul.f32 %v197, %v221
      %v224 = vrot.slane %v222, 7
      %v226 = vsub.f32 %v146, %v224
      %v227 = vperm.slane %v221, 2
      %v228 = vmul.f32 %v189, %v227
      %v229 = vperm.slane %v226, 3
      %v230 = vadd.f32 %v228, %v229
      %v231 = vxor.u32 %v230, 2147483648
      %v232 = vmul.f32 %v231, 1.442695
      %v233 = vpow.pop %v232
      %v234 = vadd.f32 %v233, 1.0
      %v235 = vrcp.pop %v234
      %v236 = vmul.f32 %v234, %v235
      %v237 = vsub.f32 1.0, %v236
      %v238 = vmul.f32 %v235, %v237
      %v239 = vadd.f32 %v235, %v238
      %vm240 = vweird.f32 %v234
      %vm241 = vweird.f32 %v235
      %vm242 = vmor %vm240, %vm241
      %v243 = vsel %vm242, %v235, %v239
      %v244 = vand.u32 2147483647, %v234
      %vm245 = vcmp.eq.f32.partialorder %v244, 8.507059e+37
      %v246 = vand.u32 %v234, 2147483648
      %v247 = vor.u32 1.1754944e-38, %v246
      %v248 = vsel %vm245, %v247, %v243
      %v249 = vmul.f32 1.0, %v248
      %v250 = vmul.f32 %v188, %v249
      %251 = vst.msk [vmem:[#allocation12] sm:$0xff] %vm90, %v250
    $region41: #{tpu_custom_call.1} parent=1 // pred_fallthru
      _
    // Predicated region
    $region42: #{tpu_custom_call.1} parent=1 // pred_check
      _
    $region43: #{tpu_custom_call.1} parent=1 // pred_check_branch
      %253 = sbr.rel (0) target = $region45
    $region44: #{tpu_custom_call.1} parent=1 // pred_region
      %255 = vsyncadd [#allocation6], 0
      %s257 = sshll.u32 [#allocation12], 4
      %s258 = int_to_ptr.vmem [resolvable:$true] %s257
      %s259 = sshll.u32 %s4, 4
      %s260 = int_to_ptr.hbm [resolvable:$true] %s259
      %262 = dma.vmem_to_hbm [thread:$0]  %s258, 128, %s260, [#allocation6]
    $region45: #{tpu_custom_call.1} parent=1 // pred_fallthru
      _
    // Predicated region
    $region46: #{tpu_custom_call.1} parent=1 // pred_check
      _
    $region47: #{tpu_custom_call.1} parent=1 // pred_check_branch
      %264 = sbr.rel (0) target = $region49
    $region48: #{tpu_custom_call.1} parent=1 // pred_region
      %266 = dma.done [#allocation6], 128
    $region49: #{tpu_custom_call.1} parent=1 // pred_fallthru
      _
    %267 = vsyncpa [#allocation5], 1
    %268 = vsyncpa [#allocation8], 1
    %269 = vsyncpa [#allocation11], 1
    %270 = vsyncpa [#allocation6], 1

</llo_original>
